<compile_context>
chip_gen: v7x
topology: tpu7x:2x2x1
jax: 0.10.0
libtpu: 0.0.40
codegen_flags: <defaults>
</compile_context>

<pallas_src>
import jax
import jax.numpy as jnp
from jax.experimental import pallas as pl
from jax.experimental.pallas import tpu as pltpu

# ----------------------------- configuration -------------------------------
IN_FEATURES = 16
CLASS_NUM = 8
CLS_BRANCH_NUM = 2
BASE_LAYER_PARAMS = [[32, 3], [32, 3]]   # [[out_channels, kernel_size], ...]
CLS_LAYER_PARAMS = [[16, 3]]
ATT_LAYER_PARAMS = [[16, 3]]

BASE_OUT = BASE_LAYER_PARAMS[-1][0]
CLS_OUT = CLS_LAYER_PARAMS[-1][0]
ATT_OUT = ATT_LAYER_PARAMS[-1][0]
NL_INTER = CLS_OUT // 2

# the branch-fusion below assumes one MDC layer per att/cls bottom (as configured)
assert len(ATT_LAYER_PARAMS) == 1 and len(CLS_LAYER_PARAMS) == 1

_CONV_KS = [k for _, k in BASE_LAYER_PARAMS] + [ATT_LAYER_PARAMS[0][1],
                                                CLS_LAYER_PARAMS[0][1]]
MAX_PAD = max(k // 2 for k in _CONV_KS)
MAX_CIN = max([IN_FEATURES] + [c for c, _ in BASE_LAYER_PARAMS])

W_SLAB_LANES = 128   # lane-dense weight slab


def _r8(v):
    return ((v + 7) // 8) * 8


# --------------------------- packed weight slab layout ----------------------
def _weight_layout():
    """Row offsets (8-aligned) of every packed weight inside ONE (R,128) slab."""
    lay = {}
    off = 0

    def put(name, rows, cols):
        nonlocal off
        assert cols <= W_SLAB_LANES
        lay[name] = (off, rows, cols)
        off = _r8(off + rows)

    cin = IN_FEATURES
    for i, (cout, k) in enumerate(BASE_LAYER_PARAMS):
        put(f'base{i}_w', k * cin, cout)
        put(f'base{i}_b', 1, cout)
        cin = cout

    # fused "branch" conv: [att | cls_0 .. cls_{N-1} | pre_graph], all on base,
    # all followed by ReLU.  pre_graph (1x1) sits in the centre tap only.
    kb = max(ATT_LAYER_PARAMS[0][1], CLS_LAYER_PARAMS[0][1], 1)
    br_cols = ATT_OUT + CLS_BRANCH_NUM * CLS_OUT + CLS_OUT
    put('branches_w', kb * BASE_OUT, br_cols)
    put('branches_b', 1, br_cols)

    put('att_head_w', 1, ATT_OUT)            # att_head weight stored transposed
    put('nl_tpg_w', CLS_OUT, 3 * NL_INTER)   # fused [theta|phi|g]
    put('nl_tpg_b', 1, 3 * NL_INTER)
    put('nl_W_w', NL_INTER, CLS_OUT)
    put('nl_W_b', 1, CLS_OUT)
    put('head_glob_w', CLS_OUT, CLS_BRANCH_NUM * CLASS_NUM)
    put('head_cls_w', CLS_BRANCH_NUM * CLS_OUT, CLS_BRANCH_NUM * CLASS_NUM)
    put('head_b', 1, CLS_BRANCH_NUM * CLASS_NUM)

    lay['_rows'] = _r8(off)
    lay['_kb'] = kb
    return lay


_W_LAYOUT = _weight_layout()
KB = _W_LAYOUT['_kb']
W_ROWS = _W_LAYOUT['_rows']


# ------------------------- packed output slab layout ------------------------
def _out_layout():
    """Channel offsets of every logical output inside the lane-dense slab."""
    lay = {}
    o = 0

    def seg(width):
        nonlocal o
        start = o
        o = start + width
        return (start, width)

    lay['base'] = seg(BASE_OUT)
    cls = [seg(CLS_OUT) for _ in range(CLS_BRANCH_NUM - 1)]
    lay['global'] = seg(CLS_OUT)
    cls.append(seg(CLS_OUT))                 # last branch adjacent to global
    lay['cls'] = cls
    lay['fuse'] = (lay['global'][0], 2 * CLS_OUT)   # [global | cls_last]
    assert lay['cls'][-1][0] == lay['global'][0] + CLS_OUT
    lay['scores'] = [seg(CLASS_NUM) for _ in range(CLS_BRANCH_NUM)]
    lay['avg'] = seg(CLASS_NUM)
    lay['attw'] = seg(1)
    lay['gscore'] = seg(CLASS_NUM)
    lay['used'] = o
    lay['width'] = max(128, ((o + 127) // 128) * 128)
    return lay


_OUT = _out_layout()
SLAB_WIDTH = _OUT['width']


# ------------------------------ fused Pallas kernel --------------------------
def _fused_backbone_kernel(x_ref, w_ref, slab_ref, halo_ref):
    """Whole BackboneNet forward for one batch element, fully resident in VMEM."""
    f32 = jnp.float32
    bf16 = jnp.bfloat16
    T = x_ref.shape[1]
    HP = MAX_PAD

    def Wv(name):                              # static slice of the weight slab
        off, rows, cols = _W_LAYOUT[name]
        return w_ref[off:off + rows, 0:cols]

    def mm(a, b):                              # bf16 MXU matmul, f32 accumulate
        return jnp.dot(a.astype(bf16), b.astype(bf16), preferred_element_type=f32)

    def im2col(v, k):
        """'same' halo via the zero-bordered scratch + one lane-concat."""
        C = v.shape[1]
        pad = k // 2
        halo_ref[HP:HP + T, 0:C] = v
        taps = [halo_ref[HP + d:HP + d + T, 0:C] for d in range(-pad, pad + 1)]
        return jnp.concatenate(taps, axis=1) if len(taps) > 1 else taps[0]

    # boundary rows of the halo scratch stay zero for every conv
    halo_ref[...] = jnp.zeros(halo_ref.shape, halo_ref.dtype)

    # TODO(synk): nn.Dropout2d is identity at inference; train-mode channel
    # dropout is not implemented.
    x = x_ref[0].astype(f32)                   # (T, in_features), channels-last

    # ---- base stack (Conv1d k=3 'same' + ReLU), one matmul per layer ---------
    h = x
    for i, (cout, k) in enumerate(BASE_LAYER_PARAMS):
        h = jnp.maximum(mm(im2col(h, k), Wv(f'base{i}_w')) + Wv(f'base{i}_b'), 0.0)
    base = h                                   # (T, BASE_OUT)

    # ---- fused branch matmul: att conv | cls_b convs | pre_graph (+ReLU) -----
    # TODO(synk): MDC is not defined in the provided source; approximated as a
    # same-padded Conv1d of the given kernel size.
    br = jnp.maximum(mm(im2col(base, KB), Wv('branches_w')) + Wv('branches_b'), 0.0)
    att_feat = br[:, 0:ATT_OUT]
    cls_cat = br[:, ATT_OUT:ATT_OUT + CLS_BRANCH_NUM * CLS_OUT]
    cls_list = [cls_cat[:, b * CLS_OUT:(b + 1) * CLS_OUT]
                for b in range(CLS_BRANCH_NUM)]
    g0 = ATT_OUT + CLS_BRANCH_NUM * CLS_OUT
    gfeat = br[:, g0:g0 + CLS_OUT]             # relu(pre_graph_conv(base))

    # ---- attention head: VPU multiply + lane reduce, exact softmax over T ----
    # (att_head bias omitted: softmax over T is invariant to a constant shift)
    att_logit = jnp.sum(att_feat * Wv('att_head_w'), axis=-1, keepdims=True)
    m = jnp.max(att_logit, axis=0, keepdims=True)
    e = jnp.exp(att_logit - m)
    att_w = e / jnp.sum(e, axis=0, keepdims=True)            # (T, 1), sums to 1

    # ---- non-local block (embedded gaussian, bn_layer=False), residual ------
    proj = mm(gfeat, Wv('nl_tpg_w')) + Wv('nl_tpg_b')         # (T, 3*inter)
    th = proj[:, 0:NL_INTER]
    ph = proj[:, NL_INTER:2 * NL_INTER]
    gg = proj[:, 2 * NL_INTER:3 * NL_INTER]
    f = jax.lax.dot_general(th.astype(bf16), ph.astype(bf16),
                            (((1,), (1,)), ((), ())),
                            preferred_element_type=f32)       # (T, T) = th @ ph.T
    p = jnp.exp(f - jnp.max(f, axis=-1, keepdims=True))
    p = p / jnp.sum(p, axis=-1, keepdims=True)                # exact softmax
    y = mm(p, gg)                                             # (T, inter)
    glob = mm(y, Wv('nl_W_w')) + Wv('nl_W_b') + gfeat         # z = W(y) + x

    # ---- cls heads fused over branches (concat folded into two matmuls) -----
    sc_both = (mm(glob, Wv('head_glob_w'))
               + mm(cls_cat, Wv('head_cls_w'))
               + Wv('head_b'))                                # (T, N*class_num)
    sc_list = [sc_both[:, b * CLASS_NUM:(b + 1) * CLASS_NUM]
               for b in range(CLS_BRANCH_NUM)]
    avg = sc_list[0]
    for b in range(1, CLS_BRANCH_NUM):
        avg = avg + sc_list[b]
    avg = avg * (1.0 / CLS_BRANCH_NUM)

    # ---- softmax-attention pooling -------------------------------------------
    gscore = jnp.sum(avg * att_w, axis=0, keepdims=True)      # (1, class_num)

    # ---- compose ONE lane-dense 128-wide row and store it once ---------------
    pieces = ([base] + cls_list[:-1] + [glob, cls_list[-1], sc_both, avg, att_w,
                                        jnp.broadcast_to(gscore, (T, CLASS_NUM))])
    used = _OUT['used']
    if SLAB_WIDTH > used:
        pieces.append(jnp.zeros((T, SLAB_WIDTH - used), f32))
    slab_ref[0] = jnp.concatenate(pieces, axis=1).astype(slab_ref.dtype)


# ----------------------------- parameter setup ------------------------------
def _init_conv(key, k, cin, cout, scale=0.1):
    kw, kb = jax.random.split(key)
    w = jax.random.normal(kw, (k, cin, cout), jnp.float32) * scale
    b = jax.random.normal(kb, (1, cout), jnp.float32) * scale
    return w, b


def _init_dense(key, cin, cout, scale=0.1):
    kw, kb = jax.random.split(key)
    w = jax.random.normal(kw, (cin, cout), jnp.float32) * scale
    b = jax.random.normal(kb, (1, cout), jnp.float32) * scale
    return w, b


def init_params(key):
    keys = iter(jax.random.split(key, 64))
    p = {}

    # base: Conv1d(k, padding=k//2) + ReLU stack
    layers, in_c = [], IN_FEATURES
    for out_c, k in BASE_LAYER_PARAMS:
        layers.append(_init_conv(next(keys), k, in_c, out_c))
        in_c = out_c
    p['base'] = layers

    # attention bottom + head
    layers, in_c = [], BASE_OUT
    for out_c, k in ATT_LAYER_PARAMS:
        layers.append(_init_conv(next(keys), k, in_c, out_c))
        in_c = out_c
    p['att_bottom'] = layers
    p['att_head'] = _init_dense(next(keys), ATT_OUT, 1)

    # global branch: pre_graph_conv + NONLocalBlock1D(cls_out, cls_out//2,
    # sub_sample=False, bn_layer=False)
    p['pre_graph'] = _init_dense(next(keys), BASE_OUT, CLS_OUT)
    # theta/phi/g 1x1 projections fused along Cout into a single matmul weight
    p['nl_tpg'] = _init_dense(next(keys), CLS_OUT, 3 * NL_INTER)
    # NONLocalBlock1D(bn_layer=False) zero-initializes W -> block starts as identity
    p['nl_W'] = (jnp.zeros((NL_INTER, CLS_OUT), jnp.float32),
                 jnp.zeros((1, CLS_OUT), jnp.float32))

    # cls bottoms (one per branch) — MDC approximated as same-padded Conv1d
    p['cls_bottoms'] = []
    for _ in range(CLS_BRANCH_NUM):
        layers, in_c = [], BASE_OUT
        for out_c, k in CLS_LAYER_PARAMS:
            layers.append(_init_conv(next(keys), k, in_c, out_c))
            in_c = out_c
        p['cls_bottoms'].append(layers)

    # cls heads: Linear(2*cls_out, class_num); rows [0:cls_out) multiply the
    # global feature, rows [cls_out:2*cls_out) the branch cls feature
    # (matches torch.cat((global, cls), dim=2)).
    p['cls_heads'] = [_init_dense(next(keys), 2 * CLS_OUT, CLASS_NUM)
                      for _ in range(CLS_BRANCH_NUM)]
    return p


def pack_params(p):
    """Pack every weight into ONE (rows, 128) f32 slab (done once, outside jit).

    NOTE: when loading trained PyTorch weights, conv weights must be permuted to
    (K, Cin, Cout), Linear weights transposed to (Cin, Cout), and theta/phi/g
    concatenated along Cout before calling this.
    """
    lay = _W_LAYOUT
    slab = jnp.zeros((W_ROWS, W_SLAB_LANES), jnp.float32)

    def put(slab, name, arr):
        off, rows, cols = lay[name]
        arr = jnp.asarray(arr, jnp.float32).reshape(rows, cols)
        return slab.at[off:off + rows, 0:cols].set(arr)

    # base convs: (K, Cin, Cout) -> (K*Cin, Cout), tap-major (matches im2col)
    for i, (w, b) in enumerate(p['base']):
        slab = put(slab, f'base{i}_w', w.reshape(-1, w.shape[-1]))
        slab = put(slab, f'base{i}_b', b)

    def embed_taps(w):                       # (k, cin, cout) -> (KB*cin, cout)
        k, cin_, cout = w.shape
        t0 = (KB - k) // 2
        full = jnp.zeros((KB, cin_, cout), jnp.float32)
        full = full.at[t0:t0 + k].set(w)
        return full.reshape(KB * cin_, cout)

    # fused branch conv weight: [att | cls_0 .. cls_{N-1} | pre_graph]
    att_w, att_b = p['att_bottom'][0]
    cols_w, cols_b = [embed_taps(att_w)], [att_b]
    for (w, b) in [br[0] for br in p['cls_bottoms']]:
        cols_w.append(embed_taps(w))
        cols_b.append(b)
    pg_w, pg_b = p['pre_graph']
    cols_w.append(embed_taps(pg_w[None, :, :]))   # 1x1 conv -> centre tap only
    cols_b.append(pg_b)
    slab = put(slab, 'branches_w', jnp.concatenate(cols_w, axis=1))
    slab = put(slab, 'branches_b', jnp.concatenate(cols_b, axis=1))

    # att head: store w^T as a row (bias dropped — softmax over T is invariant)
    ah_w, _ah_b = p['att_head']
    slab = put(slab, 'att_head_w', ah_w.T)

    # non-local block
    slab = put(slab, 'nl_tpg_w', p['nl_tpg'][0])
    slab = put(slab, 'nl_tpg_b', p['nl_tpg'][1])
    slab = put(slab, 'nl_W_w', p['nl_W'][0])
    slab = put(slab, 'nl_W_b', p['nl_W'][1])

    # cls heads: glob-rows concatenated along N; cls-rows block-diagonal
    wg = jnp.concatenate([w[0:CLS_OUT, :] for (w, _b) in p['cls_heads']], axis=1)
    wc = jnp.zeros((CLS_BRANCH_NUM * CLS_OUT, CLS_BRANCH_NUM * CLASS_NUM),
                   jnp.float32)
    for bi, (w, _b) in enumerate(p['cls_heads']):
        wc = wc.at[bi * CLS_OUT:(bi + 1) * CLS_OUT,
                   bi * CLASS_NUM:(bi + 1) * CLASS_NUM].set(w[CLS_OUT:, :])
    hb = jnp.concatenate([b for (_w, b) in p['cls_heads']], axis=1)
    slab = put(slab, 'head_glob_w', wg)
    slab = put(slab, 'head_cls_w', wc)
    slab = put(slab, 'head_b', hb)
    return {'wslab': slab}


# -------------------------------- forward ----------------------------------
def backbone_forward(packed, x_nct):
    """x_nct: (B, in_features, T) exactly like the PyTorch module input."""
    x = jnp.transpose(x_nct, (0, 2, 1)).astype(jnp.float32)   # (B, T, C)
    B, T, Cin = x.shape
    wslab = packed['wslab']
    R, L = wslab.shape
    W = SLAB_WIDTH

    slab = pl.pallas_call(
        _fused_backbone_kernel,
        out_shape=jax.ShapeDtypeStruct((B, T, W), jnp.float32),
        grid=(B,),
        in_specs=[pl.BlockSpec((1, T, Cin), lambda i: (i, 0, 0)),
                  pl.BlockSpec((R, L), lambda i: (0, 0))],     # single weight DMA
        out_specs=pl.BlockSpec((1, T, W), lambda i: (i, 0, 0)),
        scratch_shapes=[pltpu.VMEM((T + 2 * MAX_PAD, MAX_CIN), jnp.float32)],
        compiler_params=pltpu.CompilerParams(
            dimension_semantics=("parallel",)),   # v7x: one TC per batch element
    )(x, wslab)

    def cut(off_width, row=None):
        off, width = off_width
        s = slab[:, :, off:off + width]
        return s if row is None else s[:, row, :]

    base_feature = cut(_OUT['base'])                              # (B, T, 32)
    cls_features = [cut(_OUT['cls'][b]) for b in range(CLS_BRANCH_NUM)]
    fuse_feature = cut(_OUT['fuse'])                              # (B, T, 32)
    branch_scores = [cut(_OUT['scores'][b]) for b in range(CLS_BRANCH_NUM)]
    avg_score = cut(_OUT['avg'])                                  # (B, T, 8)
    att_weight = cut(_OUT['attw'])                                # (B, T, 1)
    global_score = cut(_OUT['gscore'], row=0)                     # (B, 8)

    feature_dict = {'base_feature': base_feature,
                    'cls_features': cls_features,
                    'fuse_feature': fuse_feature}
    return avg_score, att_weight, global_score, branch_scores, feature_dict


# ---------------------------------- main ------------------------------------
if __name__ == "__main__":
    key = jax.random.PRNGKey(0)
    pkey, xkey = jax.random.split(key)
    params = init_params(pkey)
    packed = pack_params(params)          # one-time weight packing (outside jit)

    B, T = 2, 16
    x = jax.random.normal(xkey, (B, IN_FEATURES, T), jnp.float32)

    fwd = jax.jit(backbone_forward)
    outs = jax.block_until_ready(fwd(packed, x))
    avg_score, att_weight, global_score, branch_scores, feature_dict = outs

    assert avg_score.shape == (B, T, CLASS_NUM)
    assert att_weight.shape == (B, T, 1)
    assert global_score.shape == (B, CLASS_NUM)
    assert len(branch_scores) == CLS_BRANCH_NUM
    assert branch_scores[0].shape == (B, T, CLASS_NUM)
    assert feature_dict['base_feature'].shape == (B, T, BASE_OUT)
    assert feature_dict['cls_features'][0].shape == (B, T, CLS_OUT)
    assert feature_dict['fuse_feature'].shape == (B, T, 2 * CLS_OUT)
    assert bool(jnp.all(jnp.isfinite(avg_score)))
    assert bool(jnp.all(jnp.isfinite(global_score)))
    # att_weight is an exact softmax over T -> sums to 1
    assert bool(jnp.allclose(jnp.sum(att_weight, axis=1), 1.0, atol=1e-3))
    # avg_score must equal the branch-score mean
    assert bool(jnp.allclose(avg_score,
                             (branch_scores[0] + branch_scores[1]) * 0.5,
                             atol=1e-4))

    print("KERNEL_OK")
</pallas_src>

<mosaic_0001>
module attributes {stable_mosaic.version = 11 : i64} {
  func.func @_fused_backbone_kernel(%arg0: i32, %arg1: memref<1x16x16xf32, #tpu.memory_space<vmem>>, %arg2: memref<368x128xf32, #tpu.memory_space<vmem>>, %arg3: memref<1x16x128xf32, #tpu.memory_space<vmem>>, %arg4: memref<18x32xf32, #tpu.memory_space<vmem>>) attributes {dimension_semantics = [#tpu.dimension_semantics<parallel>], iteration_bounds = array<i64: 2>, scalar_prefetch = 0 : i64, scratch_operands = 1 : i64, tpu.core_type = #tpu.core_type<tc>, window_params = [{transform_indices = @transform_0, window_bounds = array<i64: 1, 16, 16>}, {pipeline_mode = #tpu.pipeline_mode<synchronous>, transform_indices = @transform_1, window_bounds = array<i64: 368, 128>}, {transform_indices = @transform_2, window_bounds = array<i64: 1, 16, 128>}]} {
    %cst = arith.constant 0.000000e+00 : f32
    %0 = vector.broadcast %cst : f32 to vector<18x32xf32>
    %c0 = arith.constant 0 : index
    %c0_0 = arith.constant 0 : index
    %1 = vector.load %arg4[%c0, %c0_0] : memref<18x32xf32, #tpu.memory_space<vmem>>, vector<18x32xf32>
    tpu.vector_store %arg4[%c0, %c0_0], %0 {strides = array<i32>} : memref<18x32xf32, #tpu.memory_space<vmem>>, vector<18x32xf32>,
    %c0_1 = arith.constant 0 : index
    %c0_2 = arith.constant 0 : index
    %c0_3 = arith.constant 0 : index
    %2 = vector.load %arg1[%c0_1, %c0_2, %c0_3] : memref<1x16x16xf32, #tpu.memory_space<vmem>>, vector<1x16x16xf32>
    %3 = vector.shape_cast %2 : vector<1x16x16xf32> to vector<16x16xf32>
    %c1 = arith.constant 1 : index
    %c0_4 = arith.constant 0 : index
    %4 = vector.load %arg4[%c1, %c0_4] : memref<18x32xf32, #tpu.memory_space<vmem>>, vector<16x16xf32>
    tpu.vector_store %arg4[%c1, %c0_4], %3 {strides = array<i32>} : memref<18x32xf32, #tpu.memory_space<vmem>>, vector<16x16xf32>,
    %c0_5 = arith.constant 0 : index
    %c0_6 = arith.constant 0 : index
    %5 = vector.load %arg4[%c0_5, %c0_6] : memref<18x32xf32, #tpu.memory_space<vmem>>, vector<16x16xf32>
    %c1_7 = arith.constant 1 : index
    %c0_8 = arith.constant 0 : index
    %6 = vector.load %arg4[%c1_7, %c0_8] : memref<18x32xf32, #tpu.memory_space<vmem>>, vector<16x16xf32>
    %c2 = arith.constant 2 : index
    %c0_9 = arith.constant 0 : index
    %7 = vector.load %arg4[%c2, %c0_9] : memref<18x32xf32, #tpu.memory_space<vmem>>, vector<16x16xf32>
    %8 = tpu.concatenate %5, %6, %7 in 1 : vector<16x16xf32>, vector<16x16xf32>, vector<16x16xf32> -> vector<16x48xf32>
    %c0_10 = arith.constant 0 : index
    %c0_11 = arith.constant 0 : index
    %9 = vector.load %arg2[%c0_10, %c0_11] : memref<368x128xf32, #tpu.memory_space<vmem>>, vector<48x32xf32>
    %10 = arith.truncf %8 : vector<16x48xf32> to vector<16x48xbf16>
    %11 = arith.truncf %9 : vector<48x32xf32> to vector<48x32xbf16>
    %cst_12 = arith.constant dense<0.000000e+00> : vector<16x32xf32>
    %12 = tpu.matmul %10, %11, %cst_12 {dimension_numbers = #tpu.dot_dimension_numbers<[1], [0], [0], [1], [0, 0, 1, 1], [], []>} : vector<16x48xbf16>, vector<48x32xbf16>, vector<16x32xf32> -> vector<16x32xf32>
    %c48 = arith.constant 48 : index
    %c0_13 = arith.constant 0 : index
    %13 = vector.load %arg2[%c48, %c0_13] : memref<368x128xf32, #tpu.memory_space<vmem>>, vector<1x32xf32>
    %14 = vector.broadcast %13 : vector<1x32xf32> to vector<16x32xf32>
    %15 = arith.addf %12, %14 : vector<16x32xf32>
    %cst_14 = arith.constant 0.000000e+00 : f32
    %16 = vector.broadcast %cst_14 : f32 to vector<16x32xf32>
    %17 = arith.maximumf %15, %16 : vector<16x32xf32>
    %c1_15 = arith.constant 1 : index
    %c0_16 = arith.constant 0 : index
    %18 = vector.load %arg4[%c1_15, %c0_16] : memref<18x32xf32, #tpu.memory_space<vmem>>, vector<16x32xf32>
    tpu.vector_store %arg4[%c1_15, %c0_16], %17 {strides = array<i32>} : memref<18x32xf32, #tpu.memory_space<vmem>>, vector<16x32xf32>,
    %c0_17 = arith.constant 0 : index
    %c0_18 = arith.constant 0 : index
    %19 = vector.load %arg4[%c0_17, %c0_18] : memref<18x32xf32, #tpu.memory_space<vmem>>, vector<16x32xf32>
    %c1_19 = arith.constant 1 : index
    %c0_20 = arith.constant 0 : index
    %20 = vector.load %arg4[%c1_19, %c0_20] : memref<18x32xf32, #tpu.memory_space<vmem>>, vector<16x32xf32>
    %c2_21 = arith.constant 2 : index
    %c0_22 = arith.constant 0 : index
    %21 = vector.load %arg4[%c2_21, %c0_22] : memref<18x32xf32, #tpu.memory_space<vmem>>, vector<16x32xf32>
    %22 = tpu.concatenate %19, %20, %21 in 1 : vector<16x32xf32>, vector<16x32xf32>, vector<16x32xf32> -> vector<16x96xf32>
    %c56 = arith.constant 56 : index
    %c0_23 = arith.constant 0 : index
    %23 = vector.load %arg2[%c56, %c0_23] : memref<368x128xf32, #tpu.memory_space<vmem>>, vector<96x32xf32>
    %24 = arith.truncf %22 : vector<16x96xf32> to vector<16x96xbf16>
    %25 = arith.truncf %23 : vector<96x32xf32> to vector<96x32xbf16>
    %cst_24 = arith.constant dense<0.000000e+00> : vector<16x32xf32>
    %26 = tpu.matmul %24, %25, %cst_24 {dimension_numbers = #tpu.dot_dimension_numbers<[1], [0], [0], [1], [0, 0, 1, 1], [], []>} : vector<16x96xbf16>, vector<96x32xbf16>, vector<16x32xf32> -> vector<16x32xf32>
    %c152 = arith.constant 152 : index
    %c0_25 = arith.constant 0 : index
    %27 = vector.load %arg2[%c152, %c0_25] : memref<368x128xf32, #tpu.memory_space<vmem>>, vector<1x32xf32>
    %28 = vector.broadcast %27 : vector<1x32xf32> to vector<16x32xf32>
    %29 = arith.addf %26, %28 : vector<16x32xf32>
    %cst_26 = arith.constant 0.000000e+00 : f32
    %30 = vector.broadcast %cst_26 : f32 to vector<16x32xf32>
    %31 = arith.maximumf %29, %30 : vector<16x32xf32>
    %c1_27 = arith.constant 1 : index
    %c0_28 = arith.constant 0 : index
    %32 = vector.load %arg4[%c1_27, %c0_28] : memref<18x32xf32, #tpu.memory_space<vmem>>, vector<16x32xf32>
    tpu.vector_store %arg4[%c1_27, %c0_28], %31 {strides = array<i32>} : memref<18x32xf32, #tpu.memory_space<vmem>>, vector<16x32xf32>,
    %c0_29 = arith.constant 0 : index
    %c0_30 = arith.constant 0 : index
    %33 = vector.load %arg4[%c0_29, %c0_30] : memref<18x32xf32, #tpu.memory_space<vmem>>, vector<16x32xf32>
    %c1_31 = arith.constant 1 : index
    %c0_32 = arith.constant 0 : index
    %34 = vector.load %arg4[%c1_31, %c0_32] : memref<18x32xf32, #tpu.memory_space<vmem>>, vector<16x32xf32>
    %c2_33 = arith.constant 2 : index
    %c0_34 = arith.constant 0 : index
    %35 = vector.load %arg4[%c2_33, %c0_34] : memref<18x32xf32, #tpu.memory_space<vmem>>, vector<16x32xf32>
    %36 = tpu.concatenate %33, %34, %35 in 1 : vector<16x32xf32>, vector<16x32xf32>, vector<16x32xf32> -> vector<16x96xf32>
    %c160 = arith.constant 160 : index
    %c0_35 = arith.constant 0 : index
    %37 = vector.load %arg2[%c160, %c0_35] : memref<368x128xf32, #tpu.memory_space<vmem>>, vector<96x64xf32>
    %38 = arith.truncf %36 : vector<16x96xf32> to vector<16x96xbf16>
    %39 = arith.truncf %37 : vector<96x64xf32> to vector<96x64xbf16>
    %cst_36 = arith.constant dense<0.000000e+00> : vector<16x64xf32>
    %40 = tpu.matmul %38, %39, %cst_36 {dimension_numbers = #tpu.dot_dimension_numbers<[1], [0], [0], [1], [0, 0, 1, 1], [], []>} : vector<16x96xbf16>, vector<96x64xbf16>, vector<16x64xf32> -> vector<16x64xf32>
    %c256 = arith.constant 256 : index
    %c0_37 = arith.constant 0 : index
    %41 = vector.load %arg2[%c256, %c0_37] : memref<368x128xf32, #tpu.memory_space<vmem>>, vector<1x64xf32>
    %42 = vector.broadcast %41 : vector<1x64xf32> to vector<16x64xf32>
    %43 = arith.addf %40, %42 : vector<16x64xf32>
    %cst_38 = arith.constant 0.000000e+00 : f32
    %44 = vector.broadcast %cst_38 : f32 to vector<16x64xf32>
    %45 = arith.maximumf %43, %44 : vector<16x64xf32>
    %46 = vector.extract_strided_slice %45 {offsets = [0, 0], sizes = [16, 16], strides = [1, 1]} : vector<16x64xf32> to vector<16x16xf32>
    %47 = vector.extract_strided_slice %45 {offsets = [0, 16], sizes = [16, 32], strides = [1, 1]} : vector<16x64xf32> to vector<16x32xf32>
    %48 = vector.extract_strided_slice %47 {offsets = [0, 0], sizes = [16, 16], strides = [1, 1]} : vector<16x32xf32> to vector<16x16xf32>
    %49 = vector.extract_strided_slice %47 {offsets = [0, 16], sizes = [16, 16], strides = [1, 1]} : vector<16x32xf32> to vector<16x16xf32>
    %50 = vector.extract_strided_slice %45 {offsets = [0, 48], sizes = [16, 16], strides = [1, 1]} : vector<16x64xf32> to vector<16x16xf32>
    %c264 = arith.constant 264 : index
    %c0_39 = arith.constant 0 : index
    %51 = vector.load %arg2[%c264, %c0_39] : memref<368x128xf32, #tpu.memory_space<vmem>>, vector<1x16xf32>
    %52 = vector.broadcast %51 : vector<1x16xf32> to vector<16x16xf32>
    %53 = arith.mulf %46, %52 : vector<16x16xf32>
    %cst_40 = arith.constant dense<0.000000e+00> : vector<16xf32>
    %54 = vector.multi_reduction <add>, %53, %cst_40 [1] : vector<16x16xf32> to vector<16xf32>
    %55 = vector.shape_cast %54 : vector<16xf32> to vector<16x1xf32>
    %cst_41 = arith.constant dense<0xFF800000> : vector<1xf32>
    %56 = vector.multi_reduction <maximumf>, %55, %cst_41 [0] : vector<16x1xf32> to vector<1xf32>
    %57 = vector.shape_cast %56 : vector<1xf32> to vector<1x1xf32>
    %58 = vector.broadcast %57 : vector<1x1xf32> to vector<16x1xf32>
    %59 = arith.subf %55, %58 : vector<16x1xf32>
    %60 = math.exp %59 : vector<16x1xf32>
    %cst_42 = arith.constant dense<0.000000e+00> : vector<1xf32>
    %61 = vector.multi_reduction <add>, %60, %cst_42 [0] : vector<16x1xf32> to vector<1xf32>
    %62 = vector.shape_cast %61 : vector<1xf32> to vector<1x1xf32>
    %63 = vector.broadcast %62 : vector<1x1xf32> to vector<16x1xf32>
    %64 = arith.divf %60, %63 : vector<16x1xf32>
    %c272 = arith.constant 272 : index
    %c0_43 = arith.constant 0 : index
    %65 = vector.load %arg2[%c272, %c0_43] : memref<368x128xf32, #tpu.memory_space<vmem>>, vector<16x24xf32>
    %66 = arith.truncf %50 : vector<16x16xf32> to vector<16x16xbf16>
    %67 = arith.truncf %65 : vector<16x24xf32> to vector<16x24xbf16>
    %cst_44 = arith.constant dense<0.000000e+00> : vector<16x24xf32>
    %68 = tpu.matmul %66, %67, %cst_44 {dimension_numbers = #tpu.dot_dimension_numbers<[1], [0], [0], [1], [0, 0, 1, 1], [], []>} : vector<16x16xbf16>, vector<16x24xbf16>, vector<16x24xf32> -> vector<16x24xf32>
    %c288 = arith.constant 288 : index
    %c0_45 = arith.constant 0 : index
    %69 = vector.load %arg2[%c288, %c0_45] : memref<368x128xf32, #tpu.memory_space<vmem>>, vector<1x24xf32>
    %70 = vector.broadcast %69 : vector<1x24xf32> to vector<16x24xf32>
    %71 = arith.addf %68, %70 : vector<16x24xf32>
    %72 = vector.extract_strided_slice %71 {offsets = [0, 0], sizes = [16, 8], strides = [1, 1]} : vector<16x24xf32> to vector<16x8xf32>
    %73 = vector.extract_strided_slice %71 {offsets = [0, 8], sizes = [16, 8], strides = [1, 1]} : vector<16x24xf32> to vector<16x8xf32>
    %74 = vector.extract_strided_slice %71 {offsets = [0, 16], sizes = [16, 8], strides = [1, 1]} : vector<16x24xf32> to vector<16x8xf32>
    %75 = arith.truncf %72 : vector<16x8xf32> to vector<16x8xbf16>
    %76 = arith.truncf %73 : vector<16x8xf32> to vector<16x8xbf16>
    %cst_46 = arith.constant dense<0.000000e+00> : vector<16x16xf32>
    %77 = tpu.matmul %75, %76, %cst_46 {dimension_numbers = #tpu.dot_dimension_numbers<[1], [1], [0], [0], [0, 0, 1, 0], [], []>} : vector<16x8xbf16>, vector<16x8xbf16>, vector<16x16xf32> -> vector<16x16xf32>
    %cst_47 = arith.constant dense<0xFF800000> : vector<16xf32>
    %78 = vector.multi_reduction <maximumf>, %77, %cst_47 [1] : vector<16x16xf32> to vector<16xf32>
    %79 = vector.shape_cast %78 : vector<16xf32> to vector<16x1xf32>
    %80 = vector.broadcast %79 : vector<16x1xf32> to vector<16x16xf32>
    %81 = arith.subf %77, %80 : vector<16x16xf32>
    %82 = math.exp %81 : vector<16x16xf32>
    %cst_48 = arith.constant dense<0.000000e+00> : vector<16xf32>
    %83 = vector.multi_reduction <add>, %82, %cst_48 [1] : vector<16x16xf32> to vector<16xf32>
    %84 = vector.shape_cast %83 : vector<16xf32> to vector<16x1xf32>
    %85 = vector.broadcast %84 : vector<16x1xf32> to vector<16x16xf32>
    %86 = arith.divf %82, %85 : vector<16x16xf32>
    %87 = arith.truncf %86 : vector<16x16xf32> to vector<16x16xbf16>
    %88 = arith.truncf %74 : vector<16x8xf32> to vector<16x8xbf16>
    %cst_49 = arith.constant dense<0.000000e+00> : vector<16x8xf32>
    %89 = tpu.matmul %87, %88, %cst_49 {dimension_numbers = #tpu.dot_dimension_numbers<[1], [0], [0], [1], [0, 0, 1, 1], [], []>} : vector<16x16xbf16>, vector<16x8xbf16>, vector<16x8xf32> -> vector<16x8xf32>
    %c296 = arith.constant 296 : index
    %c0_50 = arith.constant 0 : index
    %90 = vector.load %arg2[%c296, %c0_50] : memref<368x128xf32, #tpu.memory_space<vmem>>, vector<8x16xf32>
    %91 = arith.truncf %89 : vector<16x8xf32> to vector<16x8xbf16>
    %92 = arith.truncf %90 : vector<8x16xf32> to vector<8x16xbf16>
    %cst_51 = arith.constant dense<0.000000e+00> : vector<16x16xf32>
    %93 = tpu.matmul %91, %92, %cst_51 {dimension_numbers = #tpu.dot_dimension_numbers<[1], [0], [0], [1], [0, 0, 1, 1], [], []>} : vector<16x8xbf16>, vector<8x16xbf16>, vector<16x16xf32> -> vector<16x16xf32>
    %c304 = arith.constant 304 : index
    %c0_52 = arith.constant 0 : index
    %94 = vector.load %arg2[%c304, %c0_52] : memref<368x128xf32, #tpu.memory_space<vmem>>, vector<1x16xf32>
    %95 = vector.broadcast %94 : vector<1x16xf32> to vector<16x16xf32>
    %96 = arith.addf %93, %95 : vector<16x16xf32>
    %97 = arith.addf %96, %50 : vector<16x16xf32>
    %c312 = arith.constant 312 : index
    %c0_53 = arith.constant 0 : index
    %98 = vector.load %arg2[%c312, %c0_53] : memref<368x128xf32, #tpu.memory_space<vmem>>, vector<16x16xf32>
    %99 = arith.truncf %97 : vector<16x16xf32> to vector<16x16xbf16>
    %100 = arith.truncf %98 : vector<16x16xf32> to vector<16x16xbf16>
    %cst_54 = arith.constant dense<0.000000e+00> : vector<16x16xf32>
    %101 = tpu.matmul %99, %100, %cst_54 {dimension_numbers = #tpu.dot_dimension_numbers<[1], [0], [0], [1], [0, 0, 1, 1], [], []>} : vector<16x16xbf16>, vector<16x16xbf16>, vector<16x16xf32> -> vector<16x16xf32>
    %c328 = arith.constant 328 : index
    %c0_55 = arith.constant 0 : index
    %102 = vector.load %arg2[%c328, %c0_55] : memref<368x128xf32, #tpu.memory_space<vmem>>, vector<32x16xf32>
    %103 = arith.truncf %47 : vector<16x32xf32> to vector<16x32xbf16>
    %104 = arith.truncf %102 : vector<32x16xf32> to vector<32x16xbf16>
    %cst_56 = arith.constant dense<0.000000e+00> : vector<16x16xf32>
    %105 = tpu.matmul %103, %104, %cst_56 {dimension_numbers = #tpu.dot_dimension_numbers<[1], [0], [0], [1], [0, 0, 1, 1], [], []>} : vector<16x32xbf16>, vector<32x16xbf16>, vector<16x16xf32> -> vector<16x16xf32>
    %106 = arith.addf %101, %105 : vector<16x16xf32>
    %c360 = arith.constant 360 : index
    %c0_57 = arith.constant 0 : index
    %107 = vector.load %arg2[%c360, %c0_57] : memref<368x128xf32, #tpu.memory_space<vmem>>, vector<1x16xf32>
    %108 = vector.broadcast %107 : vector<1x16xf32> to vector<16x16xf32>
    %109 = arith.addf %106, %108 : vector<16x16xf32>
    %110 = vector.extract_strided_slice %109 {offsets = [0, 0], sizes = [16, 8], strides = [1, 1]} : vector<16x16xf32> to vector<16x8xf32>
    %111 = vector.extract_strided_slice %109 {offsets = [0, 8], sizes = [16, 8], strides = [1, 1]} : vector<16x16xf32> to vector<16x8xf32>
    %112 = arith.addf %110, %111 : vector<16x8xf32>
    %cst_58 = arith.constant 5.000000e-01 : f32
    %113 = vector.broadcast %cst_58 : f32 to vector<16x8xf32>
    %114 = arith.mulf %112, %113 : vector<16x8xf32>
    %115 = vector.broadcast %64 : vector<16x1xf32> to vector<16x8xf32>
    %116 = arith.mulf %114, %115 : vector<16x8xf32>
    %cst_59 = arith.constant dense<0.000000e+00> : vector<8xf32>
    %117 = vector.multi_reduction <add>, %116, %cst_59 [0] : vector<16x8xf32> to vector<8xf32>
    %118 = vector.shape_cast %117 : vector<8xf32> to vector<1x8xf32>
    %119 = vector.shape_cast %118 : vector<1x8xf32> to vector<1x8xf32>
    %120 = vector.broadcast %119 : vector<1x8xf32> to vector<16x8xf32>
    %cst_60 = arith.constant 0.000000e+00 : f32
    %121 = vector.broadcast %cst_60 : f32 to vector<16x15xf32>
    %122 = tpu.concatenate %31, %48, %97, %49, %109, %114, %64, %120, %121 in 1 : vector<16x32xf32>, vector<16x16xf32>, vector<16x16xf32>, vector<16x16xf32>, vector<16x16xf32>, vector<16x8xf32>, vector<16x1xf32>, vector<16x8xf32>, vector<16x15xf32> -> vector<16x128xf32>
    %c0_61 = arith.constant 0 : index
    %c0_62 = arith.constant 0 : index
    %c0_63 = arith.constant 0 : index
    %123 = vector.load %arg3[%c0_61, %c0_62, %c0_63] : memref<1x16x128xf32, #tpu.memory_space<vmem>>, vector<1x16x128xf32>
    %124 = vector.shape_cast %123 : vector<1x16x128xf32> to vector<16x128xf32>
    %125 = vector.shape_cast %122 : vector<16x128xf32> to vector<1x16x128xf32>
    tpu.vector_store %arg3[%c0_61, %c0_62, %c0_63], %125 {strides = array<i32>} : memref<1x16x128xf32, #tpu.memory_space<vmem>>, vector<1x16x128xf32>,
    return
  }
  func.func @transform_0(%arg0: i32) -> (i32, i32, i32) {
    %c0_i32 = arith.constant 0 : i32
    %c0_i32_0 = arith.constant 0 : i32
    %c0_i32_1 = arith.constant 0 : i32
    return %arg0, %c0_i32, %c0_i32_0 : i32, i32, i32
  }
  func.func @transform_1(%arg0: i32) -> (i32, i32) {
    %c0_i32 = arith.constant 0 : i32
    %c0_i32_0 = arith.constant 0 : i32
    %c0_i32_1 = arith.constant 0 : i32
    return %c0_i32, %c0_i32_0 : i32, i32
  }
  func.func @transform_2(%arg0: i32) -> (i32, i32, i32) {
    %c0_i32 = arith.constant 0 : i32
    %c0_i32_0 = arith.constant 0 : i32
    %c0_i32_1 = arith.constant 0 : i32
    return %arg0, %c0_i32, %c0_i32_0 : i32, i32, i32
  }
}

</mosaic_0001>

<llo_original>
// kernel: backbone_forward.1
$region0: #{backbone_forward.1}
  #allocation0 [shape = 'u32[]', space=smem, size = 0x4, offset = 0x4, fixed_abs, tag = 'smem constant byte address 0x4 - core index']
  #allocation1 [shape = 'u32[144,128]{1,0:T(1,128)}', space=vmem, size = 0x12000, scoped, tag = 'internal scratch']
  #allocation2 [shape = 'f32[18,32]{1,0:T(8,128)}', space=vmem, size = 0x3000, scoped, tag = 'scratch operand']
  %s0 = inlined_call_operand.vmem [shape: f32[2,16,16], index: 0, kind: input, shape index: {}]
  %s1 = inlined_call_operand.hbm [shape: f32[368,128], index: 1, kind: input, shape index: {}]
  %s2 = inlined_call_operand.vmem [shape: f32[2,16,128], index: 2, kind: output, shape index: {}]
  %s3 = sld [smem:[#allocation0]]
  $region45: #{backbone_forward.1} parent=0
    _
  %s5 = ssub.s32 1, %s3
  %s6 = scalar_select 0, %s5, %s3
  $region1: #{backbone_forward.1} parent=0
    #allocation3 [shape = 'u8[188416]{0}', space=vmem, size = 0x2e000, scoped, tag = 'input window, operand 1, single buffered']
    #allocation4 [shape = 's32[2]{0}', space=sflag, size = 0x8, scoped, tag = 'scoped memory for backbone_forward.1']
    %7 = vsyncpa [#allocation4], 0
    loop: start=0, step=1, limit=4
    $region2: #{backbone_forward.1} parent=1 // loop_pre_header
      _
    $region3: #{backbone_forward.1} parent=1 // loop_header
      %s9 = sphi 0, %s13
      %p10 = scmp.ge.s32.totalorder %s9, 4
      %s19 = sphi 0, %s21
      %s22 = sphi 0, %s19
      %s23 = sphi 0, %s22
      %s39 = sphi 0, %s23
      %s43 = sphi 0, %s43
      %s45 = sphi 0, %s43
      %s46 = sphi 0, %s45
      %s60 = sphi 0, %s46
      %s66 = sphi 0, %s68
      %s69 = sphi 0, %s66
      %s70 = sphi 0, %s69
      %s86 = sphi 0, %s70
    $region4: #{backbone_forward.1} parent=1 // loop_header_branch
      %12 = sbr.rel (%p10) target = $region8
    $region5: #{backbone_forward.1} parent=1 // loop_body
      %s14 = ssub.s32 %s9, 1
      %s15 = ssub.s32 %s9, 2
      %s16 = sadd.s32 %s9, 1
      %s17 = ssub.s32 %s9, %s16
      %p18 = scmp.eq.s32.totalorder %s17, 0
      %s20 = sadd.s32 %s19, 1
      %s21 = scalar_select %p18, %s19, %s20
      %p24 = pneg %p18
      %p25 = scmp.eq.s32.totalorder %s9, 1
      %p26 = por %p24, %p25
      %p27 = scmp.ne.s32.totalorder %s19, %s22
      %p28 = scmp.eq.s32.totalorder %s9, 0
      %p29 = por %p27, %p28
      %p30 = scmp.ne.s32.totalorder %s19, %s22
      %p31 = scmp.eq.s32.totalorder %s14, 1
      %p32 = por %p30, %p31
      %p33 = scmp.ne.s32.totalorder %s22, %s23
      %p34 = scmp.eq.s32.totalorder %s14, 0
      %p35 = por %p33, %p34
      %p36 = scmp.ne.s32.totalorder %s22, %s23
      %p37 = scmp.eq.s32.totalorder %s15, 1
      %p38 = por %p36, %p37
      %p40 = scmp.ne.s32.totalorder %s23, %s39
      %p41 = scmp.eq.s32.totalorder %s15, 0
      %p42 = por %p40, %p41
      %s44 = sadd.s32 %s43, 1
      %p47 = scmp.eq.s32.totalorder %s9, 1
      %p48 = scmp.ne.s32.totalorder %s43, %s45
      %p49 = scmp.eq.s32.totalorder %s9, 0
      %p50 = por %p48, %p49
      %p51 = scmp.ne.s32.totalorder %s43, %s45
      %p52 = scmp.eq.s32.totalorder %s14, 1
      %p53 = por %p51, %p52
      %p54 = scmp.ne.s32.totalorder %s45, %s46
      %p55 = scmp.eq.s32.totalorder %s14, 0
      %p56 = por %p54, %p55
      %p57 = scmp.ne.s32.totalorder %s45, %s46
      %p58 = scmp.eq.s32.totalorder %s15, 1
      %p59 = por %p57, %p58
      %p61 = scmp.ne.s32.totalorder %s46, %s60
      %p62 = scmp.eq.s32.totalorder %s15, 0
      %p63 = por %p61, %p62
      %s64 = ssub.s32 %s9, %s16
      %p65 = scmp.eq.s32.totalorder %s64, 0
      %s67 = sadd.s32 %s66, 1
      %s68 = scalar_select %p65, %s66, %s67
      %p71 = pneg %p65
      %p72 = scmp.eq.s32.totalorder %s9, 1
      %p73 = por %p71, %p72
      %p74 = scmp.ne.s32.totalorder %s66, %s69
      %p75 = scmp.eq.s32.totalorder %s9, 0
      %p76 = por %p74, %p75
      %p77 = scmp.ne.s32.totalorder %s66, %s69
      %p78 = scmp.eq.s32.totalorder %s14, 1
      %p79 = por %p77, %p78
      %p80 = scmp.ne.s32.totalorder %s69, %s70
      %p81 = scmp.eq.s32.totalorder %s14, 0
      %p82 = por %p80, %p81
      %p83 = scmp.ne.s32.totalorder %s69, %s70
      %p84 = scmp.eq.s32.totalorder %s15, 1
      %p85 = por %p83, %p84
      %p87 = scmp.ne.s32.totalorder %s70, %s86
      %p88 = scmp.eq.s32.totalorder %s15, 0
      %p89 = por %p87, %p88
      %p90 = scmp.le.s32.totalorder 1, %s9
      %p91 = scmp.lt.s32.totalorder %s9, 3
      %p92 = pnand %p90, %p91
      %p93 = pneg %p92
      // Predicated region
      $region9: #{backbone_forward.1} parent=5 // pred_check
        _
      $region10: #{backbone_forward.1} parent=5 // pred_check_branch
        %95 = sbr.rel (%p92) target = $region12
      $region11: #{backbone_forward.1} parent=5 // pred_region
        %s96 = ssub.s32 %s9, 1
        // Predicated region
        $region13: #{backbone_forward.1} parent=11 // pred_check
          %p97 = pneg %p56
        $region14: #{backbone_forward.1} parent=11 // pred_check_branch
          %99 = sbr.rel (%p97) target = $region16
        $region15: #{backbone_forward.1} parent=11 // pred_region
          %s101 = ssub.s32 5888, 5888
          %102 = vsyncadd [#allocation4], %s101
          %s103 = sshll.u32 [#allocation3], 4
          %s104 = int_to_ptr.vmem [resolvable:$true] %s103
          %109 = dma.hbm_to_vmem [thread:$0]  %s1, 5888, %s104, [#allocation4], 128, 128, 8
        $region16: #{backbone_forward.1} parent=11 // pred_fallthru
          _
      $region12: #{backbone_forward.1} parent=5 // pred_fallthru
        _
      %p110 = scmp.lt.s32.totalorder %s9, 2
      // Predicated region
      $region17: #{backbone_forward.1} parent=5 // pred_check
        %p111 = pneg %p110
      $region18: #{backbone_forward.1} parent=5 // pred_check_branch
        %113 = sbr.rel (%p111) target = $region20
      $region19: #{backbone_forward.1} parent=5 // pred_region
        // Predicated region
        $region21: #{backbone_forward.1} parent=19 // pred_check
          %p114 = pneg %p29
        $region22: #{backbone_forward.1} parent=19 // pred_check_branch
          %116 = sbr.rel (%p114) target = $region24
        $region23: #{backbone_forward.1} parent=19 // pred_region
          %p117 = scmp.lt.s32.totalorder %s9, 1
          %s118 = scalar_select %p117, %s9, 1
          %s119 = smul.addr %s118, 2
          %s120 = smul.addr %s119, 8
          %s121 = scalar_lea.vmem %s0, %s120
        $region24: #{backbone_forward.1} parent=19 // pred_fallthru
          _
      $region20: #{backbone_forward.1} parent=5 // pred_fallthru
        _
      %p122 = scmp.le.s32.totalorder 1, %s9
      %p123 = scmp.lt.s32.totalorder %s9, 3
      %p124 = pnand %p122, %p123
      %p125 = pneg %p124
      // Predicated region
      $region25: #{backbone_forward.1} parent=5 // pred_check
        _
      $region26: #{backbone_forward.1} parent=5 // pred_check_branch
        %127 = sbr.rel (%p124) target = $region28
      $region27: #{backbone_forward.1} parent=5 // pred_region
        %s128 = ssub.s32 %s9, 1
        // Predicated region
        $region29: #{backbone_forward.1} parent=27 // pred_check
          %p129 = pneg %p56
        $region30: #{backbone_forward.1} parent=27 // pred_check_branch
          %131 = sbr.rel (%p129) target = $region32
        $region31: #{backbone_forward.1} parent=27 // pred_region
          %132 = dma.done [#allocation4], 5888
        $region32: #{backbone_forward.1} parent=27 // pred_fallthru
          _
        %p133 = scmp.lt.s32.totalorder %s14, 1
        %s134 = scalar_select %p133, %s14, 1
        %s135 = smul.addr %s134, 2
        %s136 = smul.addr %s135, 8
        %s137 = scalar_lea.vmem %s0, %s136
        %p138 = pneg %p35
        %p139 = pneg %p32
        %p140 = pneg %p56
        %p141 = pneg %p53
        %p142 = pneg %p82
        %p143 = pneg %p79
        %p144 = scmp.lt.s32.totalorder %s14, 1
        %s145 = scalar_select %p144, %s14, 1
        %s146 = smul.addr %s145, 2
        %s147 = smul.addr %s146, 8
        %s148 = scalar_lea.vmem %s2, %s147
        %p149 = scmp.lt.s32.totalorder %s14, 1
        %s150 = scalar_select %p149, %s14, 1
        %s151 = smul.addr %s150, 2
        %s152 = smul.addr %s151, 8
        %s153 = scalar_lea.vmem %s0, %s152
        %p154 = scmp.lt.s32.totalorder %s14, 1
        %s155 = scalar_select %p154, %s14, 1
        %s156 = smul.addr %s155, 2
        %s157 = smul.addr %s156, 8
        %s158 = scalar_lea.vmem %s2, %s157
        %vm160 = vcmask 261120
        %161 = vst.msk [vmem:[#allocation2] sm:$0xff] %vm160, 0.0
        %162 = vst.msk [vmem:[#allocation2 + $0x8] sm:$0xff] %vm160, 0.0
        %vm163 = vcmask 254976
        %164 = vst.msk [vmem:[#allocation2 + $0x10] sm:$0x3] %vm163, 0.0
        %v165 = vld [vmem:[%s153] sm:$0xff]
        %v166 = vld [vmem:[%s153 + $0x8] sm:$0xff]
        %vm167 = vcmask 130048
        %168 = vst.msk [vmem:[#allocation2 + $0x1] sm:$0xff] %vm167, %v165
        %169 = vst.msk [vmem:[#allocation2 + $0x9] sm:$0xff] %vm167, %v166
        %v170 = vld [vmem:[#allocation2] sm:$0xff]
        %v171 = vld [vmem:[#allocation2 + $0x8] sm:$0xff]
        %v172 = vld [vmem:[#allocation2 + $0x1] sm:$0xff]
        %v173 = vld [vmem:[#allocation2 + $0x9] sm:$0xff]
        %v174 = vld [vmem:[#allocation2 + $0x2] sm:$0xff]
        %v175 = vld [vmem:[#allocation2 + $0xa] sm:$0xff]
        %178 = vrot.lane.b32.xlu0 %v172, 16
        %v179 = vpop.permute.xlu0 %178
        %180 = vrot.lane.b32.xlu0 %v173, 16
        %v181 = vpop.permute.xlu0 %180
        %186 = vrot.lane.b32.xlu0 %v174, 32
        %v187 = vpop.permute.xlu0 %186
        %188 = vrot.lane.b32.xlu0 %v175, 32
        %v189 = vpop.permute.xlu0 %188
        %v192 = vsel %vm167, %v170, %v179
        %v193 = vsel %vm167, %v171, %v181
        %v194 = vsel %vm160, %v192, %v187
        %v195 = vsel %vm160, %v193, %v189
        %v196 = vld [vmem:[#allocation3] sm:$0xff]
        %v197 = vld [vmem:[#allocation3 + $0x8] sm:$0xff]
        %v198 = vld [vmem:[#allocation3 + $0x10] sm:$0xff]
        %v199 = vld [vmem:[#allocation3 + $0x18] sm:$0xff]
        %v200 = vld [vmem:[#allocation3 + $0x20] sm:$0xff]
        %v201 = vld [vmem:[#allocation3 + $0x28] sm:$0xff]
        %v202 = vpack.c.bf16 %v195, %v194
        %v203 = vpack.c.bf16 %v197, %v196
        %v204 = vpack.c.bf16 %v199, %v198
        %v205 = vpack.c.bf16 %v201, %v200
        %v206 = vld [vmem:[#allocation3 + $0x30] sm:$0x1]
        %v207 = vlaneseq
        %v208 = vshrl.u32 %v207, 7
        %v209 = vsub.s32 0, %v208
        %v210 = vrot.slane %v206, %v209
        %vm211 = vcmask 392192
        %v213 = vsel %vm211, %v202, 0
        %215 = vmatprep.subr.bf16.mxu0 0
        %216 = vmatpush1.bf16.msra.mxu0 %v203
        %217 = vmatprep.subr.bf16.mxu0 0
        %218 = vmatpush1.bf16.msra.mxu0 %v204
        %219 = vmatprep.subr.bf16.mxu0 0
        %220 = vmatpush1.bf16.msra.mxu0 %v205
        %221 = vmatprep.subr.bf16.mxu0 0
        %222 = vmatpush1.bf16.msra.mxu0 0
        %223 = vmatprep.subr.bf16.mxu0 0
        %224 = vmatpush1.bf16.msra.mxu0 0
        %225 = vmatprep.subr.bf16.mxu0 0
        %226 = vmatpush1.bf16.msra.mxu0 0
        %227 = vmatprep.subr.bf16.mxu0 0
        %228 = vmatpush1.bf16.msra.mxu0 0
        %229 = vmatprep.subr.bf16.mxu0 0
        %230 = vmatpush1.bf16.msra.mxu0 0
        %231 = vmatprep.subr.bf16.mxu0 0
        %232 = vmatpush1.bf16.msra.mxu0 0
        %233 = vmatprep.subr.bf16.mxu0 0
        %234 = vmatpush1.bf16.msra.mxu0 0
        %235 = vmatprep.subr.bf16.mxu0 0
        %236 = vmatpush1.bf16.msra.mxu0 0
        %237 = vmatprep.subr.bf16.mxu0 0
        %238 = vmatpush1.bf16.msra.mxu0 0
        %239 = vmatprep.subr.bf16.mxu0 0
        %240 = vmatpush1.bf16.msra.mxu0 0
        %241 = vmatprep.subr.bf16.mxu0 0
        %242 = vmatpush1.bf16.msra.mxu0 0
        %243 = vmatprep.subr.bf16.mxu0 0
        %244 = vmatpush1.bf16.msra.mxu0 0
        %245 = vmatprep.subr.bf16.mxu0 0
        %246 = vmatpush1.bf16.msra.mxu0 0
        %247 = vmatprep.mubr.bf16.mxu0 0
        %248 = vmatmul.mubr.bf16.gmra.mrb[0].mxu0 %v213
        %v249 = vpop.f32.mrb[0].mxu0
        %v250 = vadd.f32 %v210, %v249
        %v251 = vpop.f32.mrb[0].mxu0
        %v252 = vpop.f32.mrb[0].mxu0
        %v253 = vadd.f32 %v210, %v252
        %v254 = vpop.f32.mrb[0].mxu0
        %255 = vdwg.mxu0
        %v256 = vmax.f32 %v250, 0.0
        %v257 = vmax.f32 %v253, 0.0
        %258 = vst.msk [vmem:[#allocation2 + $0x1] sm:$0xff] %vm160, %v256
        %259 = vst.msk [vmem:[#allocation2 + $0x9] sm:$0xff] %vm160, %v257
        %v260 = vld [vmem:[#allocation2] sm:$0xff]
        %v261 = vld [vmem:[#allocation2 + $0x8] sm:$0xff]
        %v262 = vld [vmem:[#allocation2 + $0x1] sm:$0xff]
        %v263 = vld [vmem:[#allocation2 + $0x9] sm:$0xff]
        %v264 = vld [vmem:[#allocation2 + $0x2] sm:$0xff]
        %v265 = vld [vmem:[#allocation2 + $0xa] sm:$0xff]
        %268 = vrot.lane.b32.xlu0 %v262, 32
        %v269 = vpop.permute.xlu0 %268
        %270 = vrot.lane.b32.xlu0 %v263, 32
        %v271 = vpop.permute.xlu0 %270
        %276 = vrot.lane.b32.xlu0 %v264, 64
        %v277 = vpop.permute.xlu0 %276
        %278 = vrot.lane.b32.xlu0 %v265, 64
        %v279 = vpop.permute.xlu0 %278
        %v282 = vsel %vm160, %v260, %v269
        %v283 = vsel %vm160, %v261, %v271
        %vm284 = vcmask 523264
        %v285 = vsel %vm284, %v282, %v277
        %v286 = vsel %vm284, %v283, %v279
        %v287 = vld [vmem:[#allocation3 + $0x38] sm:$0xff]
        %v288 = vld [vmem:[#allocation3 + $0x40] sm:$0xff]
        %v289 = vld [vmem:[#allocation3 + $0x48] sm:$0xff]
        %v290 = vld [vmem:[#allocation3 + $0x50] sm:$0xff]
        %v291 = vld [vmem:[#allocation3 + $0x58] sm:$0xff]
        %v292 = vld [vmem:[#allocation3 + $0x60] sm:$0xff]
        %v293 = vld [vmem:[#allocation3 + $0x68] sm:$0xff]
        %v294 = vld [vmem:[#allocation3 + $0x70] sm:$0xff]
        %v295 = vld [vmem:[#allocation3 + $0x78] sm:$0xff]
        %v296 = vld [vmem:[#allocation3 + $0x80] sm:$0xff]
        %v297 = vld [vmem:[#allocation3 + $0x88] sm:$0xff]
        %v298 = vld [vmem:[#allocation3 + $0x90] sm:$0xff]
        %v299 = vpack.c.bf16 %v286, %v285
        %v300 = vpack.c.bf16 %v288, %v287
        %v301 = vpack.c.bf16 %v290, %v289
        %v302 = vpack.c.bf16 %v292, %v291
        %v303 = vpack.c.bf16 %v294, %v293
        %v304 = vpack.c.bf16 %v296, %v295
        %v305 = vpack.c.bf16 %v298, %v297
        %v306 = vld [vmem:[#allocation3 + $0x98] sm:$0x1]
        %v307 = vlaneseq
        %v308 = vshrl.u32 %v307, 7
        %v309 = vsub.s32 0, %v308
        %v310 = vrot.slane %v306, %v309
        %vm311 = vcmask 785408
        %v313 = vsel %vm311, %v299, 0
        %315 = vmatprep.subr.bf16.mxu0 0
        %316 = vmatpush1.bf16.msra.mxu0 %v300
        %317 = vmatprep.subr.bf16.mxu0 0
        %318 = vmatpush1.bf16.msra.mxu0 %v301
        %319 = vmatprep.subr.bf16.mxu0 0
        %320 = vmatpush1.bf16.msra.mxu0 %v302
        %321 = vmatprep.subr.bf16.mxu0 0
        %322 = vmatpush1.bf16.msra.mxu0 %v303
        %323 = vmatprep.subr.bf16.mxu0 0
        %324 = vmatpush1.bf16.msra.mxu0 %v304
        %325 = vmatprep.subr.bf16.mxu0 0
        %326 = vmatpush1.bf16.msra.mxu0 %v305
        %327 = vmatprep.subr.bf16.mxu0 0
        %328 = vmatpush1.bf16.msra.mxu0 0
        %329 = vmatprep.subr.bf16.mxu0 0
        %330 = vmatpush1.bf16.msra.mxu0 0
        %331 = vmatprep.subr.bf16.mxu0 0
        %332 = vmatpush1.bf16.msra.mxu0 0
        %333 = vmatprep.subr.bf16.mxu0 0
        %334 = vmatpush1.bf16.msra.mxu0 0
        %335 = vmatprep.subr.bf16.mxu0 0
        %336 = vmatpush1.bf16.msra.mxu0 0
        %337 = vmatprep.subr.bf16.mxu0 0
        %338 = vmatpush1.bf16.msra.mxu0 0
        %339 = vmatprep.subr.bf16.mxu0 0
        %340 = vmatpush1.bf16.msra.mxu0 0
        %341 = vmatprep.subr.bf16.mxu0 0
        %342 = vmatpush1.bf16.msra.mxu0 0
        %343 = vmatprep.subr.bf16.mxu0 0
        %344 = vmatpush1.bf16.msra.mxu0 0
        %345 = vmatprep.subr.bf16.mxu0 0
        %346 = vmatpush1.bf16.msra.mxu0 0
        %347 = vmatprep.mubr.bf16.mxu0 0
        %348 = vmatmul.mubr.bf16.gmra.mrb[0].mxu0 %v313
        %v349 = vpop.f32.mrb[0].mxu0
        %v350 = vadd.f32 %v310, %v349
        %v351 = vpop.f32.mrb[0].mxu0
        %v352 = vpop.f32.mrb[0].mxu0
        %v353 = vadd.f32 %v310, %v352
        %v354 = vpop.f32.mrb[0].mxu0
        %355 = vdwg.mxu0
        %v356 = vmax.f32 %v350, 0.0
        %v357 = vmax.f32 %v353, 0.0
        %358 = vst.msk [vmem:[#allocation2 + $0x1] sm:$0xff] %vm160, %v356
        %359 = vst.msk [vmem:[#allocation2 + $0x9] sm:$0xff] %vm160, %v357
        %v360 = vld [vmem:[#allocation2] sm:$0xff]
        %v361 = vld [vmem:[#allocation2 + $0x8] sm:$0xff]
        %v362 = vld [vmem:[#allocation2 + $0x1] sm:$0xff]
        %v363 = vld [vmem:[#allocation2 + $0x9] sm:$0xff]
        %v364 = vld [vmem:[#allocation2 + $0x2] sm:$0xff]
        %v365 = vld [vmem:[#allocation2 + $0xa] sm:$0xff]
        %368 = vrot.lane.b32.xlu0 %v362, 32
        %v369 = vpop.permute.xlu0 %368
        %370 = vrot.lane.b32.xlu0 %v363, 32
        %v371 = vpop.permute.xlu0 %370
        %376 = vrot.lane.b32.xlu0 %v364, 64
        %v377 = vpop.permute.xlu0 %376
        %378 = vrot.lane.b32.xlu0 %v365, 64
        %v379 = vpop.permute.xlu0 %378
        %v382 = vsel %vm160, %v360, %v369
        %v383 = vsel %vm160, %v361, %v371
        %v384 = vsel %vm284, %v382, %v377
        %v385 = vsel %vm284, %v383, %v379
        %v386 = vld [vmem:[#allocation3 + $0xa0] sm:$0xff]
        %v387 = vld [vmem:[#allocation3 + $0xa8] sm:$0xff]
        %v388 = vld [vmem:[#allocation3 + $0xb0] sm:$0xff]
        %v389 = vld [vmem:[#allocation3 + $0xb8] sm:$0xff]
        %v390 = vld [vmem:[#allocation3 + $0xc0] sm:$0xff]
        %v391 = vld [vmem:[#allocation3 + $0xc8] sm:$0xff]
        %v392 = vld [vmem:[#allocation3 + $0xd0] sm:$0xff]
        %v393 = vld [vmem:[#allocation3 + $0xd8] sm:$0xff]
        %v394 = vld [vmem:[#allocation3 + $0xe0] sm:$0xff]
        %v395 = vld [vmem:[#allocation3 + $0xe8] sm:$0xff]
        %v396 = vld [vmem:[#allocation3 + $0xf0] sm:$0xff]
        %v397 = vld [vmem:[#allocation3 + $0xf8] sm:$0xff]
        %v398 = vpack.c.bf16 %v385, %v384
        %v399 = vpack.c.bf16 %v387, %v386
        %v400 = vpack.c.bf16 %v389, %v388
        %v401 = vpack.c.bf16 %v391, %v390
        %v402 = vpack.c.bf16 %v393, %v392
        %v403 = vpack.c.bf16 %v395, %v394
        %v404 = vpack.c.bf16 %v397, %v396
        %v405 = vld [vmem:[#allocation3 + $0x100] sm:$0x1]
        %v406 = vlaneseq
        %v407 = vshrl.u32 %v406, 7
        %v408 = vsub.s32 0, %v407
        %v409 = vrot.slane %v405, %v408
        %v411 = vsel %vm311, %v398, 0
        %413 = vmatprep.subr.bf16.mxu0 0
        %414 = vmatpush1.bf16.msra.mxu0 %v399
        %415 = vmatprep.subr.bf16.mxu0 0
        %416 = vmatpush1.bf16.msra.mxu0 %v400
        %417 = vmatprep.subr.bf16.mxu0 0
        %418 = vmatpush1.bf16.msra.mxu0 %v401
        %419 = vmatprep.subr.bf16.mxu0 0
        %420 = vmatpush1.bf16.msra.mxu0 %v402
        %421 = vmatprep.subr.bf16.mxu0 0
        %422 = vmatpush1.bf16.msra.mxu0 %v403
        %423 = vmatprep.subr.bf16.mxu0 0
        %424 = vmatpush1.bf16.msra.mxu0 %v404
        %425 = vmatprep.subr.bf16.mxu0 0
        %426 = vmatpush1.bf16.msra.mxu0 0
        %427 = vmatprep.subr.bf16.mxu0 0
        %428 = vmatpush1.bf16.msra.mxu0 0
        %429 = vmatprep.subr.bf16.mxu0 0
        %430 = vmatpush1.bf16.msra.mxu0 0
        %431 = vmatprep.subr.bf16.mxu0 0
        %432 = vmatpush1.bf16.msra.mxu0 0
        %433 = vmatprep.subr.bf16.mxu0 0
        %434 = vmatpush1.bf16.msra.mxu0 0
        %435 = vmatprep.subr.bf16.mxu0 0
        %436 = vmatpush1.bf16.msra.mxu0 0
        %437 = vmatprep.subr.bf16.mxu0 0
        %438 = vmatpush1.bf16.msra.mxu0 0
        %439 = vmatprep.subr.bf16.mxu0 0
        %440 = vmatpush1.bf16.msra.mxu0 0
        %441 = vmatprep.subr.bf16.mxu0 0
        %442 = vmatpush1.bf16.msra.mxu0 0
        %443 = vmatprep.subr.bf16.mxu0 0
        %444 = vmatpush1.bf16.msra.mxu0 0
        %445 = vmatprep.mubr.bf16.mxu0 0
        %446 = vmatmul.mubr.bf16.gmra.mrb[0].mxu0 %v411
        %v447 = vpop.f32.mrb[0].mxu0
        %v448 = vadd.f32 %v409, %v447
        %v449 = vpop.f32.mrb[0].mxu0
        %v450 = vpop.f32.mrb[0].mxu0
        %v451 = vadd.f32 %v409, %v450
        %v452 = vpop.f32.mrb[0].mxu0
        %453 = vdwg.mxu0
        %v454 = vmax.f32 %v448, 0.0
        %v455 = vmax.f32 %v451, 0.0
        %v456 = vld [vmem:[#allocation3 + $0x108] sm:$0x1]
        %v457 = vlaneseq
        %v458 = vshrl.u32 %v457, 7
        %v459 = vsub.s32 0, %v458
        %v460 = vrot.slane %v456, %v459
        %v461 = vmul.f32 %v454, %v460
        %v462 = vmul.f32 %v455, %v460
        %v463 = vsel %vm167, %v461, 0.0
        %464 = vadd.xlane.f32.xlu0 %v463
        %v465 = vpop.xlane.xlu0 %464
        %v466 = vsel %vm167, %v462, 0.0
        %467 = vadd.xlane.f32.xlu0 %v466
        %v468 = vpop.xlane.xlu0 %467
        %v469 = vmax.f32 %v465, %v468
        %v470 = vrot.slane %v469, 4
        %v471 = vmax.f32 %v469, %v470
        %v472 = vrot.slane %v471, 2
        %v473 = vmax.f32 %v471, %v472
        %v474 = vrot.slane %v473, 1
        %v475 = vmax.f32 %v473, %v474
        %v476 = vsub.f32 %v465, %v475
        %v477 = vsub.f32 %v468, %v475
        %v478 = vmul.f32 %v476, 1.442695
        %v479 = vpow.pop %v478
        %v480 = vmul.f32 %v477, 1.442695
        %v481 = vpow.pop %v480
        %v482 = vadd.f32 %v479, %v481
        %v483 = vrot.slane %v482, 4
        %v484 = vadd.f32 %v482, %v483
        %v485 = vrot.slane %v484, 2
        %v486 = vadd.f32 %v484, %v485
        %v487 = vrot.slane %v486, 1
        %v488 = vadd.f32 %v486, %v487
        %v489 = vrcp.pop %v488
        %v490 = vmul.f32 %v479, %v489
        %v491 = vmul.f32 %v481, %v489
        %v492 = vld [vmem:[#allocation3 + $0x110] sm:$0xff]
        %v493 = vld [vmem:[#allocation3 + $0x118] sm:$0xff]
        %v494 = vpack.c.bf16 %v455, %v454
        %v495 = vpack.c.bf16 %v493, %v492
        %v496 = vld [vmem:[#allocation3 + $0x120] sm:$0x1]
        %v497 = vlaneseq
        %v498 = vshrl.u32 %v497, 7
        %v499 = vsub.s32 0, %v498
        %v500 = vrot.slane %v496, %v499
        %502 = vrot.lane.b32.xlu0 %v494, 80
        %v503 = vpop.permute.xlu0 %502
        %v505 = vsel %vm167, %v503, 0
        %507 = vmatprep.subr.bf16.mxu0 0
        %508 = vmatpush1.bf16.msra.mxu0 %v495
        %509 = vmatprep.subr.bf16.mxu0 0
        %510 = vmatpush1.bf16.msra.mxu0 0
        %511 = vmatprep.subr.bf16.mxu0 0
        %512 = vmatpush1.bf16.msra.mxu0 0
        %513 = vmatprep.subr.bf16.mxu0 0
        %514 = vmatpush1.bf16.msra.mxu0 0
        %515 = vmatprep.subr.bf16.mxu0 0
        %516 = vmatpush1.bf16.msra.mxu0 0
        %517 = vmatprep.subr.bf16.mxu0 0
        %518 = vmatpush1.bf16.msra.mxu0 0
        %519 = vmatprep.subr.bf16.mxu0 0
        %520 = vmatpush1.bf16.msra.mxu0 0
        %521 = vmatprep.subr.bf16.mxu0 0
        %522 = vmatpush1.bf16.msra.mxu0 0
        %523 = vmatprep.subr.bf16.mxu0 0
        %524 = vmatpush1.bf16.msra.mxu0 0
        %525 = vmatprep.subr.bf16.mxu0 0
        %526 = vmatpush1.bf16.msra.mxu0 0
        %527 = vmatprep.subr.bf16.mxu0 0
        %528 = vmatpush1.bf16.msra.mxu0 0
        %529 = vmatprep.subr.bf16.mxu0 0
        %530 = vmatpush1.bf16.msra.mxu0 0
        %531 = vmatprep.subr.bf16.mxu0 0
        %532 = vmatpush1.bf16.msra.mxu0 0
        %533 = vmatprep.subr.bf16.mxu0 0
        %534 = vmatpush1.bf16.msra.mxu0 0
        %535 = vmatprep.subr.bf16.mxu0 0
        %536 = vmatpush1.bf16.msra.mxu0 0
        %537 = vmatprep.subr.bf16.mxu0 0
        %538 = vmatpush1.bf16.msra.mxu0 0
        %539 = vmatprep.mubr.bf16.mxu0 0
        %540 = vmatmul.mubr.bf16.gmra.mrb[0].mxu0 %v505
        %v541 = vpop.f32.mrb[0].mxu0
        %v542 = vadd.f32 %v500, %v541
        %v543 = vpop.f32.mrb[0].mxu0
        %v544 = vpop.f32.mrb[0].mxu0
        %v545 = vadd.f32 %v500, %v544
        %v546 = vpop.f32.mrb[0].mxu0
        %547 = vdwg.mxu0
        %v548 = vpack.c.bf16 %v545, %v542
        %550 = vrot.lane.b32.xlu0 %v548, 120
        %v551 = vpop.permute.xlu0 %550
        %vm552 = vcmask 64512
        %v554 = vsel %vm552, %v548, 0
        %v557 = vsel %vm552, %v551, 0
        %559 = vmatprep.subr.bf16.mxu0 0
        %560 = vmatpush1.bf16.xpose.msra.mxu0 %v557
        %561 = vmatprep.subr.bf16.mxu0 0
        %562 = vmatpush1.bf16.xpose.msra.mxu0 0
        %563 = vmatprep.subr.bf16.mxu0 0
        %564 = vmatpush1.bf16.xpose.msra.mxu0 0
        %565 = vmatprep.subr.bf16.mxu0 0
        %566 = vmatpush1.bf16.xpose.msra.mxu0 0
        %567 = vmatprep.subr.bf16.mxu0 0
        %568 = vmatpush1.bf16.xpose.msra.mxu0 0
        %569 = vmatprep.subr.bf16.mxu0 0
        %570 = vmatpush1.bf16.xpose.msra.mxu0 0
        %571 = vmatprep.subr.bf16.mxu0 0
        %572 = vmatpush1.bf16.xpose.msra.mxu0 0
        %573 = vmatprep.subr.bf16.mxu0 0
        %574 = vmatpush1.bf16.xpose.msra.mxu0 0
        %575 = vmatprep.subr.bf16.mxu0 0
        %576 = vmatpush1.bf16.xpose.msra.mxu0 0
        %577 = vmatprep.subr.bf16.mxu0 0
        %578 = vmatpush1.bf16.xpose.msra.mxu0 0
        %579 = vmatprep.subr.bf16.mxu0 0
        %580 = vmatpush1.bf16.xpose.msra.mxu0 0
        %581 = vmatprep.subr.bf16.mxu0 0
        %582 = vmatpush1.bf16.xpose.msra.mxu0 0
        %583 = vmatprep.subr.bf16.mxu0 0
        %584 = vmatpush1.bf16.xpose.msra.mxu0 0
        %585 = vmatprep.subr.bf16.mxu0 0
        %586 = vmatpush1.bf16.xpose.msra.mxu0 0
        %587 = vmatprep.subr.bf16.mxu0 0
        %588 = vmatpush1.bf16.xpose.msra.mxu0 0
        %589 = vmatprep.subr.bf16.mxu0 0
        %590 = vmatpush1.bf16.xpose.msra.mxu0 0
        %591 = vmatprep.mubr.bf16.mxu0 0
        %592 = vmatmul.mubr.bf16.gmra.mrb[0].mxu0 %v554
        %v593 = vpop.f32.mrb[0].mxu0
        %v594 = vadd.f32 0.0, %v593
        %v595 = vpop.f32.mrb[0].mxu0
        %v596 = vpop.f32.mrb[0].mxu0
        %v597 = vadd.f32 0.0, %v596
        %v598 = vpop.f32.mrb[0].mxu0
        %599 = vdwg.mxu0
        %v600 = vsel %vm167, %v594, -inf
        %601 = vmax.xlane.f32.xlu0 %v600
        %v602 = vpop.xlane.xlu0 %601
        %v603 = vsel %vm167, %v597, -inf
        %604 = vmax.xlane.f32.xlu0 %v603
        %v605 = vpop.xlane.xlu0 %604
        %v606 = vsub.f32 %v594, %v602
        %v607 = vsub.f32 %v597, %v605
        %v608 = vmul.f32 %v606, 1.442695
        %v609 = vpow.pop %v608
        %v610 = vmul.f32 %v607, 1.442695
        %v611 = vpow.pop %v610
        %v612 = vsel %vm167, %v609, 0.0
        %613 = vadd.xlane.f32.xlu0 %v612
        %v614 = vpop.xlane.xlu0 %613
        %v615 = vsel %vm167, %v611, 0.0
        %616 = vadd.xlane.f32.xlu0 %v615
        %v617 = vpop.xlane.xlu0 %616
        %v618 = vrcp.pop %v614
        %v619 = vmul.f32 %v609, %v618
        %v620 = vrcp.pop %v617
        %v621 = vmul.f32 %v611, %v620
        %v622 = vpack.c.bf16 %v621, %v619
        %623 = vrot.lane.b32.xlu0 %v548, 112
        %v624 = vpop.permute.xlu0 %623
        %v627 = vsel %vm167, %v622, 0
        %629 = vmatprep.subr.bf16.mxu0 0
        %630 = vmatpush1.bf16.msra.mxu0 %v624
        %631 = vmatprep.subr.bf16.mxu0 0
        %632 = vmatpush1.bf16.msra.mxu0 0
        %633 = vmatprep.subr.bf16.mxu0 0
        %634 = vmatpush1.bf16.msra.mxu0 0
        %635 = vmatprep.subr.bf16.mxu0 0
        %636 = vmatpush1.bf16.msra.mxu0 0
        %637 = vmatprep.subr.bf16.mxu0 0
        %638 = vmatpush1.bf16.msra.mxu0 0
        %639 = vmatprep.subr.bf16.mxu0 0
        %640 = vmatpush1.bf16.msra.mxu0 0
        %641 = vmatprep.subr.bf16.mxu0 0
        %642 = vmatpush1.bf16.msra.mxu0 0
        %643 = vmatprep.subr.bf16.mxu0 0
        %644 = vmatpush1.bf16.msra.mxu0 0
        %645 = vmatprep.subr.bf16.mxu0 0
        %646 = vmatpush1.bf16.msra.mxu0 0
        %647 = vmatprep.subr.bf16.mxu0 0
        %648 = vmatpush1.bf16.msra.mxu0 0
        %649 = vmatprep.subr.bf16.mxu0 0
        %650 = vmatpush1.bf16.msra.mxu0 0
        %651 = vmatprep.subr.bf16.mxu0 0
        %652 = vmatpush1.bf16.msra.mxu0 0
        %653 = vmatprep.subr.bf16.mxu0 0
        %654 = vmatpush1.bf16.msra.mxu0 0
        %655 = vmatprep.subr.bf16.mxu0 0
        %656 = vmatpush1.bf16.msra.mxu0 0
        %657 = vmatprep.subr.bf16.mxu0 0
        %658 = vmatpush1.bf16.msra.mxu0 0
        %659 = vmatprep.subr.bf16.mxu0 0
        %660 = vmatpush1.bf16.msra.mxu0 0
        %661 = vmatprep.mubr.bf16.mxu0 0
        %662 = vmatmul.mubr.bf16.gmra.mrb[0].mxu0 %v627
        %v663 = vpop.f32.mrb[0].mxu0
        %v664 = vadd.f32 0.0, %v663
        %v665 = vpop.f32.mrb[0].mxu0
        %v666 = vpop.f32.mrb[0].mxu0
        %v667 = vadd.f32 0.0, %v666
        %v668 = vpop.f32.mrb[0].mxu0
        %669 = vdwg.mxu0
        %v670 = vld [vmem:[#allocation3 + $0x128] sm:$0xff]
        %v671 = vpack.c.bf16 %v667, %v664
        %v672 = vpack.c.bf16 %v670, %v670
        %v673 = vld [vmem:[#allocation3 + $0x130] sm:$0x1]
        %v674 = vlaneseq
        %v675 = vshrl.u32 %v674, 7
        %v676 = vsub.s32 0, %v675
        %v677 = vrot.slane %v673, %v676
        %v679 = vsel %vm552, %v671, 0
        %vm681 = vcmask 1043456
        %v683 = vsel %vm681, %v672, 0
        %685 = vmatprep.subr.bf16.mxu0 0
        %686 = vmatpush1.bf16.msra.mxu0 %v683
        %687 = vmatprep.subr.bf16.mxu0 0
        %688 = vmatpush1.bf16.msra.mxu0 0
        %689 = vmatprep.subr.bf16.mxu0 0
        %690 = vmatpush1.bf16.msra.mxu0 0
        %691 = vmatprep.subr.bf16.mxu0 0
        %692 = vmatpush1.bf16.msra.mxu0 0
        %693 = vmatprep.subr.bf16.mxu0 0
        %694 = vmatpush1.bf16.msra.mxu0 0
        %695 = vmatprep.subr.bf16.mxu0 0
        %696 = vmatpush1.bf16.msra.mxu0 0
        %697 = vmatprep.subr.bf16.mxu0 0
        %698 = vmatpush1.bf16.msra.mxu0 0
        %699 = vmatprep.subr.bf16.mxu0 0
        %700 = vmatpush1.bf16.msra.mxu0 0
        %701 = vmatprep.subr.bf16.mxu0 0
        %702 = vmatpush1.bf16.msra.mxu0 0
        %703 = vmatprep.subr.bf16.mxu0 0
        %704 = vmatpush1.bf16.msra.mxu0 0
        %705 = vmatprep.subr.bf16.mxu0 0
        %706 = vmatpush1.bf16.msra.mxu0 0
        %707 = vmatprep.subr.bf16.mxu0 0
        %708 = vmatpush1.bf16.msra.mxu0 0
        %709 = vmatprep.subr.bf16.mxu0 0
        %710 = vmatpush1.bf16.msra.mxu0 0
        %711 = vmatprep.subr.bf16.mxu0 0
        %712 = vmatpush1.bf16.msra.mxu0 0
        %713 = vmatprep.subr.bf16.mxu0 0
        %714 = vmatpush1.bf16.msra.mxu0 0
        %715 = vmatprep.subr.bf16.mxu0 0
        %716 = vmatpush1.bf16.msra.mxu0 0
        %717 = vmatprep.mubr.bf16.mxu0 0
        %718 = vmatmul.mubr.bf16.gmra.mrb[0].mxu0 %v679
        %v719 = vpop.f32.mrb[0].mxu0
        %v720 = vadd.f32 %v677, %v719
        %v721 = vpop.f32.mrb[0].mxu0
        %v722 = vpop.f32.mrb[0].mxu0
        %v723 = vadd.f32 %v677, %v722
        %v724 = vpop.f32.mrb[0].mxu0
        %725 = vdwg.mxu0
        %728 = vrot.lane.b32.xlu0 %v454, 80
        %v729 = vpop.permute.xlu0 %728
        %730 = vrot.lane.b32.xlu0 %v455, 80
        %v731 = vpop.permute.xlu0 %730
        %v734 = vadd.f32 %v720, %v729
        %v735 = vadd.f32 %v723, %v731
        %v736 = vld [vmem:[#allocation3 + $0x138] sm:$0xff]
        %v737 = vld [vmem:[#allocation3 + $0x140] sm:$0xff]
        %v738 = vpack.c.bf16 %v735, %v734
        %v739 = vpack.c.bf16 %v737, %v736
        %v740 = vld [vmem:[#allocation3 + $0x148] sm:$0xff]
        %v741 = vld [vmem:[#allocation3 + $0x150] sm:$0xff]
        %v742 = vld [vmem:[#allocation3 + $0x158] sm:$0xff]
        %v743 = vld [vmem:[#allocation3 + $0x160] sm:$0xff]
        %v744 = vpack.c.bf16 %v741, %v740
        %v745 = vpack.c.bf16 %v743, %v742
        %746 = vrot.lane.b32.xlu0 %v494, 112
        %v747 = vpop.permute.xlu0 %746
        %v749 = vsel %vm160, %v747, 0
        %751 = vmatprep.subr.bf16.mxu0 0
        %752 = vmatpush1.bf16.msra.mxu0 %v744
        %753 = vmatprep.subr.bf16.mxu0 0
        %754 = vmatpush1.bf16.msra.mxu0 %v745
        %755 = vmatprep.subr.bf16.mxu0 0
        %756 = vmatpush1.bf16.msra.mxu0 0
        %757 = vmatprep.subr.bf16.mxu0 0
        %758 = vmatpush1.bf16.msra.mxu0 0
        %759 = vmatprep.subr.bf16.mxu0 0
        %760 = vmatpush1.bf16.msra.mxu0 0
        %761 = vmatprep.subr.bf16.mxu0 0
        %762 = vmatpush1.bf16.msra.mxu0 0
        %763 = vmatprep.subr.bf16.mxu0 0
        %764 = vmatpush1.bf16.msra.mxu0 0
        %765 = vmatprep.subr.bf16.mxu0 0
        %766 = vmatpush1.bf16.msra.mxu0 0
        %767 = vmatprep.subr.bf16.mxu0 0
        %768 = vmatpush1.bf16.msra.mxu0 0
        %769 = vmatprep.subr.bf16.mxu0 0
        %770 = vmatpush1.bf16.msra.mxu0 0
        %771 = vmatprep.subr.bf16.mxu0 0
        %772 = vmatpush1.bf16.msra.mxu0 0
        %773 = vmatprep.subr.bf16.mxu0 0
        %774 = vmatpush1.bf16.msra.mxu0 0
        %775 = vmatprep.subr.bf16.mxu0 0
        %776 = vmatpush1.bf16.msra.mxu0 0
        %777 = vmatprep.subr.bf16.mxu0 0
        %778 = vmatpush1.bf16.msra.mxu0 0
        %779 = vmatprep.subr.bf16.mxu0 0
        %780 = vmatpush1.bf16.msra.mxu0 0
        %781 = vmatprep.subr.bf16.mxu0 0
        %782 = vmatpush1.bf16.msra.mxu0 0
        %783 = vmatprep.mubr.bf16.mxu0 0
        %784 = vmatmul.mubr.bf16.gmra.mrb[0].mxu0 %v749
        %v785 = vpop.f32.mrb[0].mxu0
        %v786 = vadd.f32 0.0, %v785
        %v787 = vpop.f32.mrb[0].mxu0
        %v788 = vpop.f32.mrb[0].mxu0
        %v789 = vadd.f32 0.0, %v788
        %v790 = vpop.f32.mrb[0].mxu0
        %791 = vdwg.mxu0
        %v793 = vsel %vm167, %v738, 0
        %795 = vmatprep.subr.bf16.mxu0 0
        %796 = vmatpush1.bf16.msra.mxu0 %v739
        %797 = vmatprep.subr.bf16.mxu0 0
        %798 = vmatpush1.bf16.msra.mxu0 0
        %799 = vmatprep.subr.bf16.mxu0 0
        %800 = vmatpush1.bf16.msra.mxu0 0
        %801 = vmatprep.subr.bf16.mxu0 0
        %802 = vmatpush1.bf16.msra.mxu0 0
        %803 = vmatprep.subr.bf16.mxu0 0
        %804 = vmatpush1.bf16.msra.mxu0 0
        %805 = vmatprep.subr.bf16.mxu0 0
        %806 = vmatpush1.bf16.msra.mxu0 0
        %807 = vmatprep.subr.bf16.mxu0 0
        %808 = vmatpush1.bf16.msra.mxu0 0
        %809 = vmatprep.subr.bf16.mxu0 0
        %810 = vmatpush1.bf16.msra.mxu0 0
        %811 = vmatprep.subr.bf16.mxu0 0
        %812 = vmatpush1.bf16.msra.mxu0 0
        %813 = vmatprep.subr.bf16.mxu0 0
        %814 = vmatpush1.bf16.msra.mxu0 0
        %815 = vmatprep.subr.bf16.mxu0 0
        %816 = vmatpush1.bf16.msra.mxu0 0
        %817 = vmatprep.subr.bf16.mxu0 0
        %818 = vmatpush1.bf16.msra.mxu0 0
        %819 = vmatprep.subr.bf16.mxu0 0
        %820 = vmatpush1.bf16.msra.mxu0 0
        %821 = vmatprep.subr.bf16.mxu0 0
        %822 = vmatpush1.bf16.msra.mxu0 0
        %823 = vmatprep.subr.bf16.mxu0 0
        %824 = vmatpush1.bf16.msra.mxu0 0
        %825 = vmatprep.subr.bf16.mxu0 0
        %826 = vmatpush1.bf16.msra.mxu0 0
        %827 = vmatprep.mubr.bf16.mxu0 0
        %828 = vmatmul.mubr.bf16.gmra.mrb[0].mxu0 %v793
        %v829 = vpop.f32.mrb[0].mxu0
        %v830 = vadd.f32 %v786, %v829
        %v831 = vpop.f32.mrb[0].mxu0
        %v832 = vpop.f32.mrb[0].mxu0
        %v833 = vadd.f32 %v789, %v832
        %v834 = vpop.f32.mrb[0].mxu0
        %835 = vdwg.mxu0
        %v836 = vld [vmem:[#allocation3 + $0x168] sm:$0x1]
        %v837 = vlaneseq
        %v838 = vshrl.u32 %v837, 7
        %v839 = vsub.s32 0, %v838
        %v840 = vrot.slane %v836, %v839
        %v841 = vadd.f32 %v830, %v840
        %v842 = vadd.f32 %v833, %v840
        %845 = vrot.lane.b32.xlu0 %v841, 120
        %v846 = vpop.permute.xlu0 %845
        %847 = vrot.lane.b32.xlu0 %v842, 120
        %v848 = vpop.permute.xlu0 %847
        %v851 = vadd.f32 %v841, %v846
        %v852 = vadd.f32 %v842, %v848
        %v853 = vmul.f32 %v851, 0.5
        %v854 = vmul.f32 %v852, 0.5
        %v855 = vmul.f32 %v853, %v490
        %v856 = vmul.f32 %v854, %v491
        %v857 = vsel %vm552, %v855, 0.0
        %v858 = vsel %vm552, %v856, 0.0
        %v859 = vadd.f32 %v857, %v858
        %v860 = vrot.slane %v859, 4
        %v861 = vadd.f32 %v859, %v860
        %v862 = vrot.slane %v861, 2
        %v863 = vadd.f32 %v861, %v862
        %v864 = vrot.slane %v863, 1
        %v865 = vadd.f32 %v863, %v864
        %866 = vrot.lane.b32.xlu0 %v454, 16
        %v867 = vpop.permute.xlu0 %866
        %868 = vrot.lane.b32.xlu0 %v455, 16
        %v869 = vpop.permute.xlu0 %868
        %874 = vrot.lane.b32.xlu0 %v734, 48
        %v875 = vpop.permute.xlu0 %874
        %876 = vrot.lane.b32.xlu0 %v735, 48
        %v877 = vpop.permute.xlu0 %876
        %880 = vrot.lane.b32.xlu0 %v454, 32
        %v881 = vpop.permute.xlu0 %880
        %882 = vrot.lane.b32.xlu0 %v455, 32
        %v883 = vpop.permute.xlu0 %882
        %886 = vrot.lane.b32.xlu0 %v841, 80
        %v887 = vpop.permute.xlu0 %886
        %888 = vrot.lane.b32.xlu0 %v842, 80
        %v889 = vpop.permute.xlu0 %888
        %894 = vrot.lane.b32.xlu0 %v853, 96
        %v895 = vpop.permute.xlu0 %894
        %896 = vrot.lane.b32.xlu0 %v854, 96
        %v897 = vpop.permute.xlu0 %896
        %901 = vrot.lane.b32.xlu0 %v865, 105
        %v902 = vpop.permute.xlu0 %901
        %v904 = vsel %vm160, %v356, %v867
        %v905 = vsel %vm160, %v357, %v869
        %v906 = vsel %vm211, %v904, %v875
        %v907 = vsel %vm211, %v905, %v877
        %v908 = vsel %vm284, %v906, %v881
        %v909 = vsel %vm284, %v907, %v883
        %vm910 = vcmask 654336
        %v911 = vsel %vm910, %v908, %v887
        %v912 = vsel %vm910, %v909, %v889
        %v913 = vsel %vm311, %v911, %v895
        %v914 = vsel %vm311, %v912, %v897
        %vm915 = vcmask 850944
        %v916 = vsel %vm915, %v913, %v490
        %v917 = vsel %vm915, %v914, %v491
        %vm918 = vcmask 859136
        %v919 = vsel %vm918, %v916, %v902
        %v920 = vsel %vm918, %v917, %v902
        %vm921 = vcmask 924672
        %v922 = vsel %vm921, %v919, 0.0
        %v923 = vsel %vm921, %v920, 0.0
        %924 = vst [vmem:[%s158] sm:$0xff] %v922
        %925 = vst [vmem:[%s158 + $0x8] sm:$0xff] %v923
        %p926 = scmp.lt.s32.totalorder %s14, 1
        %s927 = scalar_select %p926, %s14, 1
        %s928 = smul.addr %s927, 2
        %s929 = smul.addr %s928, 8
        %s930 = scalar_lea.vmem %s2, %s929
        // Predicated region
        $region33: #{backbone_forward.1} parent=27 // pred_check
          %p931 = pneg %p79
        $region34: #{backbone_forward.1} parent=27 // pred_check_branch
          %933 = sbr.rel (%p931) target = $region36
        $region35: #{backbone_forward.1} parent=27 // pred_region
          _
        $region36: #{backbone_forward.1} parent=27 // pred_fallthru
          _
      $region28: #{backbone_forward.1} parent=5 // pred_fallthru
        _
      %p934 = scmp.le.s32.totalorder 2, %s9
      // Predicated region
      $region37: #{backbone_forward.1} parent=5 // pred_check
        %p935 = pneg %p934
      $region38: #{backbone_forward.1} parent=5 // pred_check_branch
        %937 = sbr.rel (%p935) target = $region40
      $region39: #{backbone_forward.1} parent=5 // pred_region
        %s938 = ssub.s32 %s9, 2
        // Predicated region
        $region41: #{backbone_forward.1} parent=39 // pred_check
          %p939 = pneg %p85
        $region42: #{backbone_forward.1} parent=39 // pred_check_branch
          %941 = sbr.rel (%p939) target = $region44
        $region43: #{backbone_forward.1} parent=39 // pred_region
          %p942 = scmp.lt.s32.totalorder %s15, 1
          %s943 = scalar_select %p942, %s15, 1
          %s944 = smul.addr %s943, 2
          %s945 = smul.addr %s944, 8
          %s946 = scalar_lea.vmem %s2, %s945
        $region44: #{backbone_forward.1} parent=39 // pred_fallthru
          _
      $region40: #{backbone_forward.1} parent=5 // pred_fallthru
        _
    $region6: #{backbone_forward.1} parent=1 // loop_footer
      %s13 = sadd.s32 1, %s9
    $region7: #{backbone_forward.1} parent=1 // loop_footer_branch
      %8 = sbr.rel target = $region3
    $region8: #{backbone_forward.1} parent=1 // loop_exit
      _
    %947 = vsyncpa [#allocation4], 1
    %s948 = scalar_lea.sflag [#allocation4], 1
    %949 = vsyncpa %s948, 1

</llo_original>
